<compile_context>
chip_gen: v7x
topology: tpu7x:2x2x1
jax: 0.10.0
libtpu: 0.0.40
codegen_flags: <defaults>
</compile_context>

<pallas_src>
import functools

import numpy as np
import jax
import jax.numpy as jnp
from jax import lax
from jax.experimental import pallas as pl
from jax.experimental.pallas import tpu as pltpu


# --------------------------------------------------------------------------
# small helpers
# --------------------------------------------------------------------------
def _round_up(n, m):
    return -(-n // m) * m


def _round_down(n, m):
    return (n // m) * m


def _budgets():
    """(per-input-block byte budget, scoped VMEM limit) per TPU generation."""
    try:
        cap = int(getattr(pltpu.get_tpu_info(), "vmem_capacity_bytes", 0)) or (64 << 20)
    except Exception:
        cap = 64 << 20
    if cap >= (96 << 20):            # v5e / v6e: 128 MiB physical VMEM
        return 8 << 20, 64 << 20
    return 4 << 20, 40 << 20         # v7x-class: 64 MiB physical VMEM


def _identity(op, dtype):
    if op == "max":
        if jnp.issubdtype(dtype, jnp.integer):
            return int(jnp.iinfo(dtype).min)
        return -jnp.inf
    return 0


def _acc_dtype(x_dtype):
    # exact accumulation for integers, f32 for low-precision floats
    if jnp.issubdtype(x_dtype, jnp.integer):
        return jnp.int32
    return jnp.float32


# tile caps (lanes / rows per block)
_LANE_CAP = 4096       # max lanes per input block (mid path)
_TR_MID_CAP = 1024     # max reduced rows per step (mid path)
_TR_LAST_CAP = 2048    # max reduced lanes per step (last path)
_TPRE_MID_CAP = 256
_TPRE_LAST_CAP = 2048


def _mid_tiles(pre, r, post, itemsize, block_bytes):
    # lane axis: prefer covering the whole (contiguous) post row, capped.
    if post < 128:
        tpost = post                                  # full extent (allowed)
    else:
        tpost = min(_round_up(post, 128), _LANE_CAP)  # multiple of 128
    # rows budget is shared by the reduced axis (tr) and the output rows (tpre)
    rows = max(8, block_bytes // max(1, tpost * itemsize))
    tpre_min = pre if pre < 8 else 8
    if r < 8:
        tr = r                                        # full extent
    else:
        tr = min(_round_up(r, 8),
                 max(8, _round_down(rows // tpre_min, 8)),
                 _TR_MID_CAP)
    if pre < 8:
        tpre = pre                                    # full extent
    else:
        tpre = min(_round_up(pre, 8),
                   max(8, _round_down(rows // max(tr, 1), 8)),
                   _TPRE_MID_CAP)
    return tpre, tr, tpost


def _last_tiles(pre, r, itemsize, block_bytes):
    if r < 128:
        tr = r                                        # full extent, single step
    else:
        tr = min(_round_up(r, 128), _TR_LAST_CAP,
                 max(128, _round_down(block_bytes // (8 * itemsize), 128)))
    rows = max(8, block_bytes // max(1, tr * itemsize))
    if pre < 8:
        tpre = pre                                    # full extent
    else:
        tpre = min(_round_up(pre, 8), max(8, _round_down(rows, 8)), _TPRE_LAST_CAP)
    return tpre, tr


# --------------------------------------------------------------------------
# kernels
# --------------------------------------------------------------------------
def _agg_mid_kernel(x_ref, o_ref, *scratch, op, inv_r, r, tr, mask, direct):
    """Reduce axis 1 of a (TPRE, TR, TPOST) block; accumulate over grid axis 2."""
    k = pl.program_id(2)
    acc_ref = o_ref if direct else scratch[0]
    ident = _identity(op, acc_ref.dtype)

    @pl.when(k == 0)
    def _init():
        acc_ref[...] = jnp.full(acc_ref.shape, ident, dtype=acc_ref.dtype)

    x = x_ref[...].astype(acc_ref.dtype)
    if mask:  # ragged reduction tail: fill padded rows with the identity
        row = lax.broadcasted_iota(jnp.int32, x.shape, 1)
        x = jnp.where(k * tr + row < r, x, jnp.asarray(ident, x.dtype))

    if op == "max":
        acc_ref[...] = jnp.maximum(acc_ref[...], jnp.max(x, axis=1))
    else:
        acc_ref[...] = acc_ref[...] + jnp.sum(x, axis=1)

    if (not direct) or (op == "mean"):
        @pl.when(k == pl.num_programs(2) - 1)
        def _finalize():
            res = acc_ref[...]
            if op == "mean":
                res = res * jnp.asarray(inv_r, res.dtype)
            o_ref[...] = res.astype(o_ref.dtype)


def _agg_last_kernel(x_ref, o_ref, acc_ref, *, op, inv_r, r, tr, mask):
    """Reduce the lane axis of a (TPRE, TR) block; accumulate over grid axis 1.

    The accumulator is (TPRE, 128): the steady state is element-wise lane-group
    accumulation (pure VPU); the cross-lane reduce is deferred to the last step.
    """
    k = pl.program_id(1)
    ident = _identity(op, acc_ref.dtype)

    @pl.when(k == 0)
    def _init():
        acc_ref[...] = jnp.full(acc_ref.shape, ident, dtype=acc_ref.dtype)

    x = x_ref[...].astype(acc_ref.dtype)
    if mask:  # ragged reduction tail: fill padded lanes with the identity
        lane = lax.broadcasted_iota(jnp.int32, x.shape, 1)
        x = jnp.where(k * tr + lane < r, x, jnp.asarray(ident, x.dtype))

    if tr % 128 == 0:
        acc = acc_ref[...]
        for c in range(tr // 128):                     # static slices: free
            sl = x[:, c * 128:(c + 1) * 128]
            acc = jnp.maximum(acc, sl) if op == "max" else acc + sl
        acc_ref[...] = acc
    else:
        # r < 128 => tr == r (full extent) and this is the only reduction step.
        red = (jnp.max if op == "max" else jnp.sum)(x, axis=-1, keepdims=True)
        cur = acc_ref[:, 0:1]
        acc_ref[:, 0:1] = jnp.maximum(cur, red) if op == "max" else cur + red

    @pl.when(k == pl.num_programs(1) - 1)
    def _finalize():
        a = acc_ref[...]
        if op == "max":
            res = jnp.max(a, axis=-1, keepdims=True)
        else:
            res = jnp.sum(a, axis=-1, keepdims=True)
            if op == "mean":
                res = res * jnp.asarray(inv_r, res.dtype)
        o_ref[...] = res.astype(o_ref.dtype)


# --------------------------------------------------------------------------
# pallas_call wrappers
# --------------------------------------------------------------------------
def _aggregate_mid(x3, op):
    pre, r, post = x3.shape
    itemsize = x3.dtype.itemsize
    block_bytes, vmem_limit = _budgets()
    tpre, tr, tpost = _mid_tiles(pre, r, post, itemsize, block_bytes)

    # Accumulate directly in the output block when it is exact: f32, or max.
    direct = (op == "max") or (x3.dtype == jnp.float32)
    scratch = [] if direct else [pltpu.VMEM((tpre, tpost), _acc_dtype(x3.dtype))]

    grid = (pl.cdiv(pre, tpre), pl.cdiv(post, tpost), pl.cdiv(r, tr))
    kernel = functools.partial(_agg_mid_kernel, op=op, inv_r=1.0 / r,
                               r=r, tr=tr, mask=(r % tr != 0), direct=direct)

    return pl.pallas_call(
        kernel,
        out_shape=jax.ShapeDtypeStruct((pre, post), x3.dtype),
        grid_spec=pltpu.PrefetchScalarGridSpec(
            num_scalar_prefetch=0,
            grid=grid,
            in_specs=[pl.BlockSpec((tpre, tr, tpost), lambda i, j, k: (i, k, j))],
            out_specs=pl.BlockSpec((tpre, tpost), lambda i, j, k: (i, j)),
            scratch_shapes=scratch,
        ),
        compiler_params=pltpu.CompilerParams(
            dimension_semantics=("parallel", "parallel", "arbitrary"),
            vmem_limit_bytes=vmem_limit,
        ),
    )(x3)


def _aggregate_last(x2, op):
    pre, r = x2.shape
    itemsize = x2.dtype.itemsize
    block_bytes, vmem_limit = _budgets()
    tpre, tr = _last_tiles(pre, r, itemsize, block_bytes)
    acc_dt = _acc_dtype(x2.dtype)

    grid = (pl.cdiv(pre, tpre), pl.cdiv(r, tr))
    kernel = functools.partial(_agg_last_kernel, op=op, inv_r=1.0 / r,
                               r=r, tr=tr, mask=(r % tr != 0))

    # TODO(synk): for very small r a lane-dense (pre//G, G) output layout would
    # avoid 1-lane-wide partial stores; kept (pre, 1) for simplicity.
    return pl.pallas_call(
        kernel,
        out_shape=jax.ShapeDtypeStruct((pre, 1), x2.dtype),
        grid_spec=pltpu.PrefetchScalarGridSpec(
            num_scalar_prefetch=0,
            grid=grid,
            in_specs=[pl.BlockSpec((tpre, tr), lambda i, k: (i, k))],
            out_specs=pl.BlockSpec((tpre, 1), lambda i, k: (i, 0)),
            scratch_shapes=[pltpu.VMEM((tpre, 128), acc_dt)],
        ),
        compiler_params=pltpu.CompilerParams(
            dimension_semantics=("parallel", "arbitrary"),
            vmem_limit_bytes=vmem_limit,
        ),
    )(x2)


def _aggregate_run(x, op, a, b):
    """Reduce the contiguous axis run [a..b] of x with a single kernel pass."""
    shape = x.shape
    pre = int(np.prod(shape[:a], dtype=np.int64)) if a > 0 else 1
    r = int(np.prod(shape[a:b + 1], dtype=np.int64))
    post = int(np.prod(shape[b + 1:], dtype=np.int64)) if b < x.ndim - 1 else 1
    out_shape = shape[:a] + shape[b + 1:]
    if r == 1:  # degenerate reduction: identical values for sum/mean/max
        return x.reshape(out_shape)
    if post > 1:
        out2 = _aggregate_mid(x.reshape(pre, r, post), op)
    else:
        out2 = _aggregate_last(x.reshape(pre, r), op)
    return out2.reshape(out_shape)


def pallas_aggregate(x, func, dim):
    """Reproduces Aggregate(func, dim).forward(x).

    func: one of "sum", "mean", "max"  (for max only the values are returned,
          exactly like the module's `result[0]`).
    dim:  int or tuple of ints.
    """
    assert func in ("sum", "mean", "max"), func
    ndim = x.ndim
    dims = [dim] if isinstance(dim, int) else list(dim)
    dims = sorted({d % ndim for d in dims})

    # Coalesce adjacent reduced axes into runs -> one kernel pass per run.
    runs = []
    start = prev = dims[0]
    for d in dims[1:]:
        if d == prev + 1:
            prev = d
        else:
            runs.append((start, prev))
            start = prev = d
    runs.append((start, prev))

    # Process highest run first so lower axis indices stay valid.
    for a, b in reversed(runs):
        x = _aggregate_run(x, func, a, b)
    return x


# --------------------------------------------------------------------------
# self-test
# --------------------------------------------------------------------------
if __name__ == "__main__":
    key = jax.random.PRNGKey(0)
    x = jax.random.normal(key, (2, 4, 16, 16), dtype=jnp.float32)

    # Aggregate(torch.sum/mean/max, dim=...) forward equivalents.
    y_sum = pallas_aggregate(x, "sum", 1)
    y_mean = pallas_aggregate(x, "mean", 1)
    y_max = pallas_aggregate(x, "max", 1)
    y_max_last = pallas_aggregate(x, "max", -1)          # last-axis path
    y_sum_hw = pallas_aggregate(x, "sum", (2, 3))        # coalesced single pass
    y_mean_hw = pallas_aggregate(x, "mean", (2, 3))

    # Odd / unaligned shapes: cdiv grids + reduction-axis masking + partial tiles.
    z = jax.random.normal(jax.random.PRNGKey(1), (20, 300, 12), dtype=jnp.float32)
    z_sum1 = pallas_aggregate(z, "sum", 1)               # mid path, masked r tail
    z_max2 = pallas_aggregate(z, "max", 2)               # last path, r < 128
    z2 = jax.random.normal(jax.random.PRNGKey(2), (24, 300), dtype=jnp.float32)
    z2_sum = pallas_aggregate(z2, "sum", 1)              # last path, masked lanes
    z2_mean = pallas_aggregate(z2, "mean", -1)

    # bf16: scratch-f32 accumulation (sum) and native-dtype accumulation (max).
    xb = x.astype(jnp.bfloat16)
    yb_sum = pallas_aggregate(xb, "sum", 1)
    yb_max = pallas_aggregate(xb, "max", 1)

    jax.block_until_ready((y_sum, y_mean, y_max, y_max_last, y_sum_hw, y_mean_hw,
                           z_sum1, z_max2, z2_sum, z2_mean, yb_sum, yb_max))

    assert y_sum.shape == (2, 16, 16) and y_sum.dtype == x.dtype
    assert y_mean.shape == (2, 16, 16)
    assert y_max.shape == (2, 16, 16)
    assert y_max_last.shape == (2, 4, 16)
    assert y_sum_hw.shape == (2, 4)
    assert yb_sum.dtype == jnp.bfloat16

    np.testing.assert_allclose(np.asarray(y_sum), np.asarray(jnp.sum(x, axis=1)),
                               rtol=1e-5, atol=1e-5)
    np.testing.assert_allclose(np.asarray(y_mean), np.asarray(jnp.mean(x, axis=1)),
                               rtol=1e-5, atol=1e-5)
    np.testing.assert_allclose(np.asarray(y_max), np.asarray(jnp.max(x, axis=1)),
                               rtol=1e-5, atol=1e-5)
    np.testing.assert_allclose(np.asarray(y_max_last), np.asarray(jnp.max(x, axis=-1)),
                               rtol=1e-5, atol=1e-5)
    np.testing.assert_allclose(np.asarray(y_sum_hw), np.asarray(jnp.sum(x, axis=(2, 3))),
                               rtol=1e-5, atol=1e-5)
    np.testing.assert_allclose(np.asarray(y_mean_hw), np.asarray(jnp.mean(x, axis=(2, 3))),
                               rtol=1e-5, atol=1e-5)
    np.testing.assert_allclose(np.asarray(z_sum1), np.asarray(jnp.sum(z, axis=1)),
                               rtol=1e-5, atol=1e-4)
    np.testing.assert_allclose(np.asarray(z_max2), np.asarray(jnp.max(z, axis=2)),
                               rtol=1e-5, atol=1e-5)
    np.testing.assert_allclose(np.asarray(z2_sum), np.asarray(jnp.sum(z2, axis=1)),
                               rtol=1e-5, atol=1e-4)
    np.testing.assert_allclose(np.asarray(z2_mean), np.asarray(jnp.mean(z2, axis=-1)),
                               rtol=1e-5, atol=1e-5)
    ref_b = np.asarray(jnp.sum(xb.astype(jnp.float32), axis=1))
    np.testing.assert_allclose(np.asarray(yb_sum).astype(np.float32), ref_b,
                               rtol=1e-2, atol=1e-2)
    np.testing.assert_allclose(np.asarray(yb_max).astype(np.float32),
                               np.asarray(jnp.max(xb, axis=1)).astype(np.float32),
                               rtol=0, atol=0)

    print("KERNEL_OK")
</pallas_src>

<mosaic_0001>
module attributes {stable_mosaic.version = 11 : i64} {
  func.func @_agg_mid_kernel(%arg0: i32, %arg1: i32, %arg2: i32, %arg3: memref<2x4x256xf32, #tpu.memory_space<vmem>>, %arg4: memref<2x256xf32, #tpu.memory_space<vmem>>) attributes {dimension_semantics = [#tpu.dimension_semantics<parallel>, #tpu.dimension_semantics<parallel>, #tpu.dimension_semantics<arbitrary>], iteration_bounds = array<i64: 1, 1, 1>, scalar_prefetch = 0 : i64, scratch_operands = 0 : i64, tpu.core_type = #tpu.core_type<tc>, window_params = [{transform_indices = @transform_0, window_bounds = array<i64: 2, 4, 256>}, {transform_indices = @transform_1, window_bounds = array<i64: 2, 256>}]} {
    %c0_i32 = arith.constant 0 : i32
    %0 = arith.cmpi eq, %arg2, %c0_i32 : i32
    %1 = arith.extui %0 : i1 to i32
    %c0_i32_0 = arith.constant 0 : i32
    %2 = arith.cmpi ne, %1, %c0_i32_0 : i32
    scf.if %2 {
      %cst_7 = arith.constant 0.000000e+00 : f32
      %8 = vector.broadcast %cst_7 : f32 to vector<2x256xf32>
      %c0_8 = arith.constant 0 : index
      %c0_9 = arith.constant 0 : index
      %9 = vector.load %arg4[%c0_8, %c0_9] : memref<2x256xf32, #tpu.memory_space<vmem>>, vector<2x256xf32>
      tpu.vector_store %arg4[%c0_8, %c0_9], %8 {strides = array<i32>} : memref<2x256xf32, #tpu.memory_space<vmem>>, vector<2x256xf32>,
    } else {
    }
    %c0 = arith.constant 0 : index
    %c0_1 = arith.constant 0 : index
    %c0_2 = arith.constant 0 : index
    %3 = vector.load %arg3[%c0, %c0_1, %c0_2] : memref<2x4x256xf32, #tpu.memory_space<vmem>>, vector<2x4x256xf32>
    %c0_3 = arith.constant 0 : index
    %c0_4 = arith.constant 0 : index
    %4 = vector.load %arg4[%c0_3, %c0_4] : memref<2x256xf32, #tpu.memory_space<vmem>>, vector<2x256xf32>
    %cst = arith.constant dense<0.000000e+00> : vector<2x256xf32>
    %5 = vector.multi_reduction <add>, %3, %cst [1] : vector<2x4x256xf32> to vector<2x256xf32>
    %6 = arith.addf %4, %5 : vector<2x256xf32>
    %c0_5 = arith.constant 0 : index
    %c0_6 = arith.constant 0 : index
    %7 = vector.load %arg4[%c0_5, %c0_6] : memref<2x256xf32, #tpu.memory_space<vmem>>, vector<2x256xf32>
    tpu.vector_store %arg4[%c0_5, %c0_6], %6 {strides = array<i32>} : memref<2x256xf32, #tpu.memory_space<vmem>>, vector<2x256xf32>,
    return
  }
  func.func @transform_0(%arg0: i32, %arg1: i32, %arg2: i32) -> (i32, i32, i32) {
    %c0_i32 = arith.constant 0 : i32
    return %arg0, %arg2, %arg1 : i32, i32, i32
  }
  func.func @transform_1(%arg0: i32, %arg1: i32, %arg2: i32) -> (i32, i32) {
    %c0_i32 = arith.constant 0 : i32
    return %arg0, %arg1 : i32, i32
  }
}

</mosaic_0001>

<llo_original>
// kernel: tpu_custom_call.1
$region0: #{tpu_custom_call.1}
  #allocation0 [shape = 'u32[]', space=smem, size = 0x4, offset = 0x4, fixed_abs, tag = 'smem constant byte address 0x4 - core index']
  #allocation1 [shape = 'u32[144,128]{1,0:T(1,128)}', space=vmem, size = 0x12000, scoped, tag = 'internal scratch']
  %s0 = inlined_call_operand.hbm [shape: f32[2,4,256], index: 0, kind: input, shape index: {}]
  %s1 = inlined_call_operand.hbm [shape: f32[2,256], index: 1, kind: output, shape index: {}]
  %s2 = sld [smem:[#allocation0]]
  $region22: #{tpu_custom_call.1} parent=0
    _
  %s4 = ssub.s32 1, %s2
  %s5 = scalar_select 0, %s4, %s2
  $region1: #{tpu_custom_call.1} parent=0
    #allocation2 [shape = 'u8[8192]{0}', space=vmem, size = 0x2000, scoped, tag = 'input window, operand 0, single buffered']
    #allocation3 [shape = 's32[1]{0}', space=sflag, size = 0x4, scoped, tag = 'scoped memory for tpu_custom_call.1']
    #allocation4 [shape = 's32[1]{0}', space=sflag, size = 0x4, scoped, tag = 'scoped memory for tpu_custom_call.1']
    #allocation5 [shape = 'u8[2048]{0}', space=vmem, size = 0x800, scoped, tag = 'output window, operand 0, single buffered']
    %6 = vsyncpa [#allocation3], 0
    %7 = vsyncpa [#allocation4], 0
    // Predicated region
    $region2: #{tpu_custom_call.1} parent=1 // pred_check
      _
    $region3: #{tpu_custom_call.1} parent=1 // pred_check_branch
      %9 = sbr.rel (0) target = $region5
    $region4: #{tpu_custom_call.1} parent=1 // pred_region
      %s11 = ssub.s32 256, 256
      %12 = vsyncadd [#allocation3], %s11
      %s13 = sshll.u32 [#allocation2], 4
      %s14 = int_to_ptr.vmem [resolvable:$true] %s13
      %19 = dma.hbm_to_vmem [thread:$0]  %s0, 256, %s14, [#allocation3], 128, 128, 8
    $region5: #{tpu_custom_call.1} parent=1 // pred_fallthru
      _
    // Predicated region
    $region6: #{tpu_custom_call.1} parent=1 // pred_check
      _
    $region7: #{tpu_custom_call.1} parent=1 // pred_check_branch
      %21 = sbr.rel (0) target = $region9
    $region8: #{tpu_custom_call.1} parent=1 // pred_region
      %22 = dma.done [#allocation3], 256
    $region9: #{tpu_custom_call.1} parent=1 // pred_fallthru
      _
    %p23 = scmp.eq.s32.totalorder 0, 0
    // Predicated region
    $region10: #{tpu_custom_call.1} parent=1 // pred_check
      %p24 = pneg %p23
    $region11: #{tpu_custom_call.1} parent=1 // pred_check_branch
      %26 = sbr.rel (%p24) target = $region13
    $region12: #{tpu_custom_call.1} parent=1 // pred_region
      %27 = vst [vmem:[#allocation5] sm:$0xf] 0.0
    $region13: #{tpu_custom_call.1} parent=1 // pred_fallthru
      _
    %v28 = vld [vmem:[#allocation2] sm:$0xff]
    %v29 = vld [vmem:[#allocation2 + $0x8] sm:$0xff]
    %v30 = vld [vmem:[#allocation5] sm:$0xf]
    %v33 = vcombine.high %v28, %v28
    %v34 = vcombine.high %v29, %v29
    %vm37 = vcmask 1043456
    %v38 = vsel %vm37, %v28, 0.0
    %v39 = vrot.slane %v38, 4
    %v40 = vadd.f32 %v38, %v39
    %v41 = vrot.slane %v40, 2
    %v42 = vadd.f32 %v40, %v41
    %v43 = vrot.slane %v42, 1
    %v44 = vadd.f32 %v42, %v43
    %v45 = vsel %vm37, %v33, 0.0
    %v46 = vrot.slane %v45, 4
    %v47 = vadd.f32 %v45, %v46
    %v48 = vrot.slane %v47, 2
    %v49 = vadd.f32 %v47, %v48
    %v50 = vrot.slane %v49, 1
    %v51 = vadd.f32 %v49, %v50
    %v52 = vsel %vm37, %v29, 0.0
    %v53 = vrot.slane %v52, 4
    %v54 = vadd.f32 %v52, %v53
    %v55 = vrot.slane %v54, 2
    %v56 = vadd.f32 %v54, %v55
    %v57 = vrot.slane %v56, 1
    %v58 = vadd.f32 %v56, %v57
    %v59 = vsel %vm37, %v34, 0.0
    %v60 = vrot.slane %v59, 4
    %v61 = vadd.f32 %v59, %v60
    %v62 = vrot.slane %v61, 2
    %v63 = vadd.f32 %v61, %v62
    %v64 = vrot.slane %v63, 1
    %v65 = vadd.f32 %v63, %v64
    %v70 = vcombine.low %v44, %v51
    %v72 = vunpack.c.l.s4 1983009808
    %v73 = vunpack.c.0.s8 %v72
    %v74 = vlaneseq
    %v75 = vshrl.u32 %v74, 7
    %v76 = vsub.s32 %v73, %v75
    %v77 = vrot.slane %v70, %v76
    %v78 = vcombine.low %v58, %v65
    %v80 = vunpack.c.l.s4 1983009808
    %v81 = vunpack.c.0.s8 %v80
    %v82 = vlaneseq
    %v83 = vshrl.u32 %v82, 7
    %v84 = vsub.s32 %v81, %v83
    %v85 = vrot.slane %v78, %v84
    %vm86 = vcmask 1044484
    %v87 = vsel %vm86, %v77, %v77
    %vm88 = vcmask 1046534
    %v89 = vsel %vm88, %v77, %v87
    %v90 = vrot.slane %v85, 7
    %vm91 = vcmask 1041409
    %v92 = vsel %vm91, %v90, %v89
    %vm93 = vcmask 1043459
    %v94 = vsel %vm93, %v90, %v92
    %vm95 = vcmask 1045509
    %v96 = vsel %vm95, %v90, %v94
    %vm97 = vcmask 1047559
    %v98 = vsel %vm97, %v90, %v96
    %v100 = vadd.f32 %v30, %v98
    %101 = vst [vmem:[#allocation5] sm:$0xf] %v100
    // Predicated region
    $region14: #{tpu_custom_call.1} parent=1 // pred_check
      _
    $region15: #{tpu_custom_call.1} parent=1 // pred_check_branch
      %103 = sbr.rel (0) target = $region17
    $region16: #{tpu_custom_call.1} parent=1 // pred_region
      %s105 = ssub.s32 64, 64
      %106 = vsyncadd [#allocation4], %s105
      %s108 = sshll.u32 [#allocation5], 4
      %s109 = int_to_ptr.vmem [resolvable:$true] %s108
      %111 = dma.vmem_to_hbm [thread:$0]  %s109, 64, %s1, [#allocation4]
    $region17: #{tpu_custom_call.1} parent=1 // pred_fallthru
      _
    // Predicated region
    $region18: #{tpu_custom_call.1} parent=1 // pred_check
      _
    $region19: #{tpu_custom_call.1} parent=1 // pred_check_branch
      %113 = sbr.rel (0) target = $region21
    $region20: #{tpu_custom_call.1} parent=1 // pred_region
      %114 = dma.done [#allocation4], 64
    $region21: #{tpu_custom_call.1} parent=1 // pred_fallthru
      _
    %115 = vsyncpa [#allocation3], 1
    %116 = vsyncpa [#allocation4], 1

</llo_original>
